<compile_context>
chip_gen: v7x
topology: tpu7x:2x2x1
jax: 0.10.0
libtpu: 0.0.40
codegen_flags: <defaults>
</compile_context>

<pallas_src>
import jax
import jax.numpy as jnp
from jax.experimental import pallas as pl
from jax.experimental.pallas import tpu as pltpu

# Synthetic stand-ins for the sc2sensor unit-id tables (only their lengths
# matter for the parameter shapes).
_OLD2_NONNEUTRAL_IDS = list(range(63))   # -> embed_param: (63, E)
_OLD2_NEUTRAL_IDS = list(range(31))


def _embedding_kernel(idx_ref, wt_ref, out_ref):
    """One grid step: gather TM embedding rows via W^T @ one-hot on the MXU.

    idx_ref: (1, TM)       int32 ids, already shifted by +1 (0 == no-unit row)
    wt_ref:  (E, V_pad)    float32 transposed table (col 0 = no-unit row)
    out_ref: (E, TM)       float32, lane-dense output block
    """
    idx = idx_ref[...]                                    # (1, TM)
    wt = wt_ref[...]                                      # (E, V_pad)
    vocab_pad = wt.shape[1]
    tm = idx.shape[1]
    row_iota = jax.lax.broadcasted_iota(jnp.int32, (vocab_pad, tm), 0)
    onehot = (row_iota == idx).astype(wt.dtype)           # (V_pad, TM) one-hot
    out_ref[...] = jnp.dot(
        wt, onehot, preferred_element_type=jnp.float32
    ).astype(out_ref.dtype)


def prepare_unit_embedding_table(embed_param, embed_no_unit_param,
                                 *, is_weight_logit=False):
    """Call-invariant preprocessing (hoisted out of the forward path).

    Returns W^T of shape (E, V_pad) with V_pad a multiple of 128; row 0 of the
    original table (the no-unit row) becomes column 0. Sigmoid (logit-weights
    path) is applied here once instead of every grid step.
    """
    weights = jnp.concatenate([embed_no_unit_param, embed_param], axis=0)  # (V, E)
    if is_weight_logit:
        weights = jax.nn.sigmoid(weights)
    vocab = weights.shape[0]
    vocab_pad = max(128, ((vocab + 127) // 128) * 128)
    weights = jnp.pad(weights, ((0, vocab_pad - vocab), (0, 0)))
    return jnp.transpose(weights).astype(jnp.float32)                      # (E, V_pad)


def _choose_tile(n, tm_max=2048, min_steps=2):
    """Pick a lane-dense tile TM (multiple of 128) and padded length N_pad.

    Prefers large TM (fewer grid steps / less fixed overhead) but keeps at
    least `min_steps` grid steps when possible so the parallel grid axis can
    shard across v7x's two TensorCores.
    """
    n128 = max(128, ((n + 127) // 128) * 128)
    tm = max(128, (min(tm_max, n128) // 128) * 128)
    while tm > 128 and pl.cdiv(n, tm) < min_steps:
        tm = max(128, ((tm // 2) // 128) * 128)
    n_pad = pl.cdiv(n, tm) * tm
    return tm, n_pad


def starcraft_unit_embedding_apply(x, table_t, *, tm_max=2048):
    """Run the embedding gather given the preprocessed W^T table.

    x:        int array of unit ids, any shape, values in [-1, num_ids - 1].
    table_t:  (E, V_pad) float32 from prepare_unit_embedding_table.
    returns:  float32 array of shape x.shape + (E,)
    """
    embed_size, vocab_pad = table_t.shape
    orig_shape = x.shape

    idx = (x.reshape(-1) + 1).astype(jnp.int32)
    n = idx.shape[0]
    tm, n_pad = _choose_tile(n, tm_max=tm_max)
    idx = jnp.pad(idx, (0, n_pad - n)).reshape(1, n_pad)   # pad lanes hit row 0

    out_t = pl.pallas_call(
        _embedding_kernel,
        out_shape=jax.ShapeDtypeStruct((embed_size, n_pad), jnp.float32),
        grid_spec=pltpu.PrefetchScalarGridSpec(
            num_scalar_prefetch=0,
            grid=(n_pad // tm,),
            in_specs=[
                pl.BlockSpec((1, tm), lambda i: (0, i)),                  # ids tile (lane-major)
                pl.BlockSpec((embed_size, vocab_pad), lambda i: (0, 0)),  # resident W^T
            ],
            out_specs=pl.BlockSpec((embed_size, tm), lambda i: (0, i)),   # lane-dense out
        ),
        compiler_params=pltpu.CompilerParams(
            dimension_semantics=("parallel",),
        ),
    )(idx, table_t)

    # One cheap XLA transpose back to channel-last layout.
    return out_t[:, :n].T.reshape(orig_shape + (embed_size,))


def starcraft_unit_embedding(x, embed_param, embed_no_unit_param,
                             *, is_weight_logit=False, tm_max=2048):
    """Convenience wrapper matching _OLD_StarCraftUnitEmbedding.forward(x)."""
    table_t = prepare_unit_embedding_table(
        embed_param, embed_no_unit_param, is_weight_logit=is_weight_logit)
    return starcraft_unit_embedding_apply(x, table_t, tm_max=tm_max)


def _reference(x, embed_param, embed_no_unit_param, *, is_weight_logit=False):
    weights = jnp.concatenate([embed_no_unit_param, embed_param], axis=0)
    if is_weight_logit:
        weights = jax.nn.sigmoid(weights)
    return jnp.take(weights, (x + 1).astype(jnp.int32), axis=0)


if __name__ == "__main__":
    key = jax.random.PRNGKey(0)
    k_param, k_x = jax.random.split(key)

    embed_size = 8
    num_ids = len(_OLD2_NONNEUTRAL_IDS)          # non-neutral branch (default)

    # Deterministic synthetic parameters (module __init__ gives the shapes;
    # values randomized so the gather is actually exercised).
    embed_param = jax.random.normal(k_param, (num_ids, embed_size), jnp.float32)
    embed_no_unit_param = jnp.zeros((1, embed_size), jnp.float32)

    # Unit-id map: batch=2, spatial 16x16, ids in [-1, num_ids - 1].
    x = jax.random.randint(k_x, (2, 16, 16), minval=-1, maxval=num_ids,
                           dtype=jnp.int32)

    # Default path (table prep hoisted once, kernel applied per call).
    table_t = prepare_unit_embedding_table(embed_param, embed_no_unit_param,
                                           is_weight_logit=False)
    out = jax.block_until_ready(starcraft_unit_embedding_apply(x, table_t))
    ref = _reference(x, embed_param, embed_no_unit_param)
    assert out.shape == x.shape + (embed_size,)
    assert jnp.allclose(out, ref, atol=1e-5, rtol=1e-5)

    # Logit-weights path (sigmoid hoisted into table prep, applied once).
    table_t_logit = prepare_unit_embedding_table(embed_param, embed_no_unit_param,
                                                 is_weight_logit=True)
    out_l = jax.block_until_ready(starcraft_unit_embedding_apply(x, table_t_logit))
    ref_l = _reference(x, embed_param, embed_no_unit_param, is_weight_logit=True)
    assert jnp.allclose(out_l, ref_l, atol=1e-5, rtol=1e-5)

    print("KERNEL_OK")
</pallas_src>

<mosaic_0001>
module attributes {stable_mosaic.version = 11 : i64} {
  func.func @_embedding_kernel(%arg0: i32, %arg1: memref<1x256xi32, #tpu.memory_space<vmem>>, %arg2: memref<8x128xf32, #tpu.memory_space<vmem>>, %arg3: memref<8x256xf32, #tpu.memory_space<vmem>>) attributes {dimension_semantics = [#tpu.dimension_semantics<parallel>], iteration_bounds = array<i64: 2>, scalar_prefetch = 0 : i64, scratch_operands = 0 : i64, tpu.core_type = #tpu.core_type<tc>, window_params = [{transform_indices = @transform_0, window_bounds = array<i64: 1, 256>}, {pipeline_mode = #tpu.pipeline_mode<synchronous>, transform_indices = @transform_1, window_bounds = array<i64: 8, 128>}, {transform_indices = @transform_2, window_bounds = array<i64: 8, 256>}]} {
    %c0 = arith.constant 0 : index
    %c0_0 = arith.constant 0 : index
    %0 = vector.load %arg1[%c0, %c0_0] : memref<1x256xi32, #tpu.memory_space<vmem>>, vector<1x256xi32>
    %c0_1 = arith.constant 0 : index
    %c0_2 = arith.constant 0 : index
    %1 = vector.load %arg2[%c0_1, %c0_2] : memref<8x128xf32, #tpu.memory_space<vmem>>, vector<8x128xf32>
    %2 = tpu.iota {dimensions = array<i32: 0>} : vector<128x256xi32>
    %3 = vector.broadcast %0 : vector<1x256xi32> to vector<128x256xi32>
    %4 = arith.cmpi eq, %2, %3 : vector<128x256xi32>
    %5 = arith.extui %4 : vector<128x256xi1> to vector<128x256xi32>
    %6 = arith.sitofp %5 : vector<128x256xi32> to vector<128x256xf32>
    %cst = arith.constant dense<0.000000e+00> : vector<8x256xf32>
    %7 = tpu.matmul %1, %6, %cst {dimension_numbers = #tpu.dot_dimension_numbers<[1], [0], [0], [1], [0, 0, 1, 1], [], []>} : vector<8x128xf32>, vector<128x256xf32>, vector<8x256xf32> -> vector<8x256xf32>
    %c0_3 = arith.constant 0 : index
    %c0_4 = arith.constant 0 : index
    %8 = vector.load %arg3[%c0_3, %c0_4] : memref<8x256xf32, #tpu.memory_space<vmem>>, vector<8x256xf32>
    tpu.vector_store %arg3[%c0_3, %c0_4], %7 {strides = array<i32>} : memref<8x256xf32, #tpu.memory_space<vmem>>, vector<8x256xf32>,
    return
  }
  func.func @transform_0(%arg0: i32) -> (i32, i32) {
    %c0_i32 = arith.constant 0 : i32
    %c0_i32_0 = arith.constant 0 : i32
    return %c0_i32, %arg0 : i32, i32
  }
  func.func @transform_1(%arg0: i32) -> (i32, i32) {
    %c0_i32 = arith.constant 0 : i32
    %c0_i32_0 = arith.constant 0 : i32
    %c0_i32_1 = arith.constant 0 : i32
    return %c0_i32, %c0_i32_0 : i32, i32
  }
  func.func @transform_2(%arg0: i32) -> (i32, i32) {
    %c0_i32 = arith.constant 0 : i32
    %c0_i32_0 = arith.constant 0 : i32
    return %c0_i32, %arg0 : i32, i32
  }
}

</mosaic_0001>

<llo_original>
// kernel: tpu_custom_call.1
$region0: #{tpu_custom_call.1}
  #allocation0 [shape = 'u32[]', space=smem, size = 0x4, offset = 0x4, fixed_abs, tag = 'smem constant byte address 0x4 - core index']
  #allocation1 [shape = 'u32[144,128]{1,0:T(1,128)}', space=vmem, size = 0x12000, scoped, tag = 'internal scratch']
  %s0 = inlined_call_operand.hbm [shape: s32[1,512], index: 0, kind: input, shape index: {}]
  %s1 = inlined_call_operand.hbm [shape: f32[8,128], index: 1, kind: input, shape index: {}]
  %s2 = inlined_call_operand.hbm [shape: f32[8,512], index: 2, kind: output, shape index: {}]
  %s3 = sld [smem:[#allocation0]]
  $region49: #{tpu_custom_call.1} parent=0
    _
  %s5 = ssub.s32 1, %s3
  %s6 = scalar_select 0, %s5, %s3
  $region1: #{tpu_custom_call.1} parent=0
    #allocation2 [shape = 'u8[2048]{0}', space=vmem, size = 0x800, scoped, tag = 'input window, operand 0']
    #allocation3 [shape = 's32[2]{0}', space=sflag, size = 0x8, scoped, tag = 'scoped memory for tpu_custom_call.1']
    #allocation4 [shape = 's32[2]{0}', space=sflag, size = 0x8, scoped, tag = 'scoped memory for tpu_custom_call.1']
    #allocation5 [shape = 'u8[4096]{0}', space=vmem, size = 0x1000, scoped, tag = 'input window, operand 1, single buffered']
    #allocation6 [shape = 's32[1]{0}', space=sflag, size = 0x4, scoped, tag = 'scoped memory for tpu_custom_call.1']
    #allocation7 [shape = 'u8[16384]{0}', space=vmem, size = 0x4000, scoped, tag = 'output window, operand 0']
    %7 = vsyncpa [#allocation3], 0
    %s8 = scalar_lea.sflag [#allocation3], 1
    %9 = vsyncpa %s8, 0
    %10 = vsyncpa [#allocation6], 0
    %11 = vsyncpa [#allocation4], 0
    %s12 = scalar_lea.sflag [#allocation4], 1
    %13 = vsyncpa %s12, 0
    loop: start=0, step=1, limit=4
    $region2: #{tpu_custom_call.1} parent=1 // loop_pre_header
      _
    $region3: #{tpu_custom_call.1} parent=1 // loop_header
      %s15 = sphi 0, %s19
      %p16 = scmp.ge.s32.totalorder %s15, 4
      %s25 = sphi 0, %s27
      %s28 = sphi 0, %s25
      %s29 = sphi 0, %s28
      %s45 = sphi 0, %s29
      %s49 = sphi 0, %s49
      %s51 = sphi 0, %s49
      %s52 = sphi 0, %s51
      %s66 = sphi 0, %s52
      %s72 = sphi 0, %s74
      %s75 = sphi 0, %s72
      %s76 = sphi 0, %s75
      %s92 = sphi 0, %s76
    $region4: #{tpu_custom_call.1} parent=1 // loop_header_branch
      %18 = sbr.rel (%p16) target = $region8
    $region5: #{tpu_custom_call.1} parent=1 // loop_body
      %s20 = ssub.s32 %s15, 1
      %s21 = ssub.s32 %s15, 2
      %s22 = sadd.s32 %s15, 1
      %s23 = ssub.s32 %s15, %s22
      %p24 = scmp.eq.s32.totalorder %s23, 0
      %s26 = sadd.s32 %s25, 1
      %s27 = scalar_select %p24, %s25, %s26
      %p30 = pneg %p24
      %p31 = scmp.eq.s32.totalorder %s15, 1
      %p32 = por %p30, %p31
      %p33 = scmp.ne.s32.totalorder %s25, %s28
      %p34 = scmp.eq.s32.totalorder %s15, 0
      %p35 = por %p33, %p34
      %p36 = scmp.ne.s32.totalorder %s25, %s28
      %p37 = scmp.eq.s32.totalorder %s20, 1
      %p38 = por %p36, %p37
      %p39 = scmp.ne.s32.totalorder %s28, %s29
      %p40 = scmp.eq.s32.totalorder %s20, 0
      %p41 = por %p39, %p40
      %p42 = scmp.ne.s32.totalorder %s28, %s29
      %p43 = scmp.eq.s32.totalorder %s21, 1
      %p44 = por %p42, %p43
      %p46 = scmp.ne.s32.totalorder %s29, %s45
      %p47 = scmp.eq.s32.totalorder %s21, 0
      %p48 = por %p46, %p47
      %s50 = sadd.s32 %s49, 1
      %p53 = scmp.eq.s32.totalorder %s15, 1
      %p54 = scmp.ne.s32.totalorder %s49, %s51
      %p55 = scmp.eq.s32.totalorder %s15, 0
      %p56 = por %p54, %p55
      %p57 = scmp.ne.s32.totalorder %s49, %s51
      %p58 = scmp.eq.s32.totalorder %s20, 1
      %p59 = por %p57, %p58
      %p60 = scmp.ne.s32.totalorder %s51, %s52
      %p61 = scmp.eq.s32.totalorder %s20, 0
      %p62 = por %p60, %p61
      %p63 = scmp.ne.s32.totalorder %s51, %s52
      %p64 = scmp.eq.s32.totalorder %s21, 1
      %p65 = por %p63, %p64
      %p67 = scmp.ne.s32.totalorder %s52, %s66
      %p68 = scmp.eq.s32.totalorder %s21, 0
      %p69 = por %p67, %p68
      %s70 = ssub.s32 %s15, %s22
      %p71 = scmp.eq.s32.totalorder %s70, 0
      %s73 = sadd.s32 %s72, 1
      %s74 = scalar_select %p71, %s72, %s73
      %p77 = pneg %p71
      %p78 = scmp.eq.s32.totalorder %s15, 1
      %p79 = por %p77, %p78
      %p80 = scmp.ne.s32.totalorder %s72, %s75
      %p81 = scmp.eq.s32.totalorder %s15, 0
      %p82 = por %p80, %p81
      %p83 = scmp.ne.s32.totalorder %s72, %s75
      %p84 = scmp.eq.s32.totalorder %s20, 1
      %p85 = por %p83, %p84
      %p86 = scmp.ne.s32.totalorder %s75, %s76
      %p87 = scmp.eq.s32.totalorder %s20, 0
      %p88 = por %p86, %p87
      %p89 = scmp.ne.s32.totalorder %s75, %s76
      %p90 = scmp.eq.s32.totalorder %s21, 1
      %p91 = por %p89, %p90
      %p93 = scmp.ne.s32.totalorder %s76, %s92
      %p94 = scmp.eq.s32.totalorder %s21, 0
      %p95 = por %p93, %p94
      %p96 = scmp.le.s32.totalorder 1, %s15
      %p97 = scmp.lt.s32.totalorder %s15, 3
      %p98 = pnand %p96, %p97
      %p99 = pneg %p98
      // Predicated region
      $region9: #{tpu_custom_call.1} parent=5 // pred_check
        _
      $region10: #{tpu_custom_call.1} parent=5 // pred_check_branch
        %101 = sbr.rel (%p98) target = $region12
      $region11: #{tpu_custom_call.1} parent=5 // pred_region
        %s102 = ssub.s32 %s15, 1
        // Predicated region
        $region13: #{tpu_custom_call.1} parent=11 // pred_check
          %p103 = pneg %p62
        $region14: #{tpu_custom_call.1} parent=11 // pred_check_branch
          %105 = sbr.rel (%p103) target = $region16
        $region15: #{tpu_custom_call.1} parent=11 // pred_region
          %s107 = ssub.s32 128, 128
          %108 = vsyncadd [#allocation6], %s107
          %s110 = sshll.u32 [#allocation5], 4
          %s111 = int_to_ptr.vmem [resolvable:$true] %s110
          %113 = dma.hbm_to_vmem [thread:$0]  %s1, 128, %s111, [#allocation6]
        $region16: #{tpu_custom_call.1} parent=11 // pred_fallthru
          _
      $region12: #{tpu_custom_call.1} parent=5 // pred_fallthru
        _
      %p114 = scmp.lt.s32.totalorder %s15, 2
      // Predicated region
      $region17: #{tpu_custom_call.1} parent=5 // pred_check
        %p115 = pneg %p114
      $region18: #{tpu_custom_call.1} parent=5 // pred_check_branch
        %117 = sbr.rel (%p115) target = $region20
      $region19: #{tpu_custom_call.1} parent=5 // pred_region
        // Predicated region
        $region21: #{tpu_custom_call.1} parent=19 // pred_check
          %p118 = pneg %p35
        $region22: #{tpu_custom_call.1} parent=19 // pred_check_branch
          %120 = sbr.rel (%p118) target = $region24
        $region23: #{tpu_custom_call.1} parent=19 // pred_region
          %s121 = sand.u32 %s25, 1
          %s122 = scalar_lea.sflag [#allocation3], %s121
          %s123 = sand.u32 %s25, 1
          %s124 = smul.addr %s123, 2
          %s125 = scalar_lea.vmem [#allocation2], %s124
          %s126 = smul.u32 2, %s15
          %s128 = ssub.s32 32, 32
          %129 = vsyncadd %s122, %s128
          %s130 = smul.addr %s126, 16
          %s131 = scalar_lea.hbm %s0, %s130
          %s133 = sshll.u32 %s125, 4
          %s134 = int_to_ptr.vmem [resolvable:$true] %s133
          %136 = dma.hbm_to_vmem [thread:$0]  %s131, 32, %s134, %s122
        $region24: #{tpu_custom_call.1} parent=19 // pred_fallthru
          _
      $region20: #{tpu_custom_call.1} parent=5 // pred_fallthru
        _
      %p137 = scmp.le.s32.totalorder 1, %s15
      %p138 = scmp.lt.s32.totalorder %s15, 3
      %p139 = pnand %p137, %p138
      %p140 = pneg %p139
      // Predicated region
      $region25: #{tpu_custom_call.1} parent=5 // pred_check
        _
      $region26: #{tpu_custom_call.1} parent=5 // pred_check_branch
        %142 = sbr.rel (%p139) target = $region28
      $region27: #{tpu_custom_call.1} parent=5 // pred_region
        %s143 = ssub.s32 %s15, 1
        %s144 = sand.u32 %s28, 1
        %s145 = scalar_lea.sflag [#allocation3], %s144
        %s146 = sand.u32 %s28, 1
        %s147 = smul.addr %s146, 2
        %s148 = scalar_lea.vmem [#allocation2], %s147
        // Predicated region
        $region29: #{tpu_custom_call.1} parent=27 // pred_check
          %p149 = pneg %p41
        $region30: #{tpu_custom_call.1} parent=27 // pred_check_branch
          %151 = sbr.rel (%p149) target = $region32
        $region31: #{tpu_custom_call.1} parent=27 // pred_region
          %152 = dma.done %s145, 32
        $region32: #{tpu_custom_call.1} parent=27 // pred_fallthru
          _
        // Predicated region
        $region33: #{tpu_custom_call.1} parent=27 // pred_check
          %p153 = pneg %p62
        $region34: #{tpu_custom_call.1} parent=27 // pred_check_branch
          %155 = sbr.rel (%p153) target = $region36
        $region35: #{tpu_custom_call.1} parent=27 // pred_region
          %156 = dma.done [#allocation6], 128
        $region36: #{tpu_custom_call.1} parent=27 // pred_fallthru
          _
        %s157 = sand.u32 %s28, 1
        %s158 = scalar_lea.sflag [#allocation3], %s157
        %s159 = sand.u32 %s28, 1
        %s160 = smul.addr %s159, 2
        %s161 = scalar_lea.vmem [#allocation2], %s160
        %p162 = pneg %p41
        %p163 = pneg %p38
        %p164 = pneg %p62
        %p165 = pneg %p59
        %p166 = pneg %p88
        %p167 = pneg %p85
        %s168 = sand.u32 %s75, 1
        %s169 = scalar_lea.sflag [#allocation4], %s168
        %s170 = sand.u32 %s75, 1
        %s171 = smul.addr %s170, 16
        %s172 = scalar_lea.vmem [#allocation7], %s171
        %s173 = smul.u32 2, %s20
        %s174 = smul.u32 2, %s20
        %v175 = vld [vmem:[%s148] sm:$0x3]
        %v176 = vld [vmem:[#allocation5] sm:$0xff]
        %v177 = vlaneseq
        %v178 = vshrl.u32 %v177, 7
        %v179 = vadd.s32 %v178, 8
        %v180 = vadd.s32 %v178, 16
        %v181 = vadd.s32 %v178, 24
        %v182 = vadd.s32 %v178, 32
        %v183 = vadd.s32 %v178, 40
        %v184 = vadd.s32 %v178, 48
        %v185 = vadd.s32 %v178, 56
        %v186 = vadd.s32 %v178, 64
        %v187 = vadd.s32 %v178, 72
        %v188 = vadd.s32 %v178, 80
        %v189 = vadd.s32 %v178, 88
        %v190 = vadd.s32 %v178, 96
        %v191 = vadd.s32 %v178, 104
        %v192 = vadd.s32 %v178, 112
        %v193 = vadd.s32 %v178, 120
        %v194 = vlaneseq
        %v195 = vshrl.u32 %v194, 7
        %v196 = vsub.s32 0, %v195
        %v197 = vrot.slane %v175, %v196
        %v198 = vlaneseq
        %v199 = vshrl.u32 %v198, 7
        %v200 = vsub.s32 1, %v199
        %v201 = vrot.slane %v175, %v200
        %vm202 = vcmp.eq.s32.totalorder %v178, %v197
        %vm203 = vcmp.eq.s32.totalorder %v178, %v201
        %vm204 = vcmp.eq.s32.totalorder %v179, %v197
        %vm205 = vcmp.eq.s32.totalorder %v179, %v201
        %vm206 = vcmp.eq.s32.totalorder %v180, %v197
        %vm207 = vcmp.eq.s32.totalorder %v180, %v201
        %vm208 = vcmp.eq.s32.totalorder %v181, %v197
        %vm209 = vcmp.eq.s32.totalorder %v181, %v201
        %vm210 = vcmp.eq.s32.totalorder %v182, %v197
        %vm211 = vcmp.eq.s32.totalorder %v182, %v201
        %vm212 = vcmp.eq.s32.totalorder %v183, %v197
        %vm213 = vcmp.eq.s32.totalorder %v183, %v201
        %vm214 = vcmp.eq.s32.totalorder %v184, %v197
        %vm215 = vcmp.eq.s32.totalorder %v184, %v201
        %vm216 = vcmp.eq.s32.totalorder %v185, %v197
        %vm217 = vcmp.eq.s32.totalorder %v185, %v201
        %vm218 = vcmp.eq.s32.totalorder %v186, %v197
        %vm219 = vcmp.eq.s32.totalorder %v186, %v201
        %vm220 = vcmp.eq.s32.totalorder %v187, %v197
        %vm221 = vcmp.eq.s32.totalorder %v187, %v201
        %vm222 = vcmp.eq.s32.totalorder %v188, %v197
        %vm223 = vcmp.eq.s32.totalorder %v188, %v201
        %vm224 = vcmp.eq.s32.totalorder %v189, %v197
        %vm225 = vcmp.eq.s32.totalorder %v189, %v201
        %vm226 = vcmp.eq.s32.totalorder %v190, %v197
        %vm227 = vcmp.eq.s32.totalorder %v190, %v201
        %vm228 = vcmp.eq.s32.totalorder %v191, %v197
        %vm229 = vcmp.eq.s32.totalorder %v191, %v201
        %vm230 = vcmp.eq.s32.totalorder %v192, %v197
        %vm231 = vcmp.eq.s32.totalorder %v192, %v201
        %vm232 = vcmp.eq.s32.totalorder %v193, %v197
        %vm233 = vcmp.eq.s32.totalorder %v193, %v201
        %v234 = vsel %vm202, 1, 0
        %v235 = vsel %vm203, 1, 0
        %v236 = vsel %vm204, 1, 0
        %v237 = vsel %vm205, 1, 0
        %v238 = vsel %vm206, 1, 0
        %v239 = vsel %vm207, 1, 0
        %v240 = vsel %vm208, 1, 0
        %v241 = vsel %vm209, 1, 0
        %v242 = vsel %vm210, 1, 0
        %v243 = vsel %vm211, 1, 0
        %v244 = vsel %vm212, 1, 0
        %v245 = vsel %vm213, 1, 0
        %v246 = vsel %vm214, 1, 0
        %v247 = vsel %vm215, 1, 0
        %v248 = vsel %vm216, 1, 0
        %v249 = vsel %vm217, 1, 0
        %v250 = vsel %vm218, 1, 0
        %v251 = vsel %vm219, 1, 0
        %v252 = vsel %vm220, 1, 0
        %v253 = vsel %vm221, 1, 0
        %v254 = vsel %vm222, 1, 0
        %v255 = vsel %vm223, 1, 0
        %v256 = vsel %vm224, 1, 0
        %v257 = vsel %vm225, 1, 0
        %v258 = vsel %vm226, 1, 0
        %v259 = vsel %vm227, 1, 0
        %v260 = vsel %vm228, 1, 0
        %v261 = vsel %vm229, 1, 0
        %v262 = vsel %vm230, 1, 0
        %v263 = vsel %vm231, 1, 0
        %v264 = vsel %vm232, 1, 0
        %v265 = vsel %vm233, 1, 0
        %v266 = vcvt.s32.f32 %v234
        %v267 = vcvt.s32.f32 %v235
        %v268 = vcvt.s32.f32 %v236
        %v269 = vcvt.s32.f32 %v237
        %v270 = vcvt.s32.f32 %v238
        %v271 = vcvt.s32.f32 %v239
        %v272 = vcvt.s32.f32 %v240
        %v273 = vcvt.s32.f32 %v241
        %v274 = vcvt.s32.f32 %v242
        %v275 = vcvt.s32.f32 %v243
        %v276 = vcvt.s32.f32 %v244
        %v277 = vcvt.s32.f32 %v245
        %v278 = vcvt.s32.f32 %v246
        %v279 = vcvt.s32.f32 %v247
        %v280 = vcvt.s32.f32 %v248
        %v281 = vcvt.s32.f32 %v249
        %v282 = vcvt.s32.f32 %v250
        %v283 = vcvt.s32.f32 %v251
        %v284 = vcvt.s32.f32 %v252
        %v285 = vcvt.s32.f32 %v253
        %v286 = vcvt.s32.f32 %v254
        %v287 = vcvt.s32.f32 %v255
        %v288 = vcvt.s32.f32 %v256
        %v289 = vcvt.s32.f32 %v257
        %v290 = vcvt.s32.f32 %v258
        %v291 = vcvt.s32.f32 %v259
        %v292 = vcvt.s32.f32 %v260
        %v293 = vcvt.s32.f32 %v261
        %v294 = vcvt.s32.f32 %v262
        %v295 = vcvt.s32.f32 %v263
        %v296 = vcvt.s32.f32 %v264
        %v297 = vcvt.s32.f32 %v265
        %298 = vmatprep.subr.mxu0 %v267
        %299 = vmatpush1.msra.mxu0 %v266
        %300 = vmatprep.subr.mxu0 %v269
        %301 = vmatpush1.msra.mxu0 %v268
        %302 = vmatprep.subr.mxu0 %v271
        %303 = vmatpush1.msra.mxu0 %v270
        %304 = vmatprep.subr.mxu0 %v273
        %305 = vmatpush1.msra.mxu0 %v272
        %306 = vmatprep.subr.mxu0 %v275
        %307 = vmatpush1.msra.mxu0 %v274
        %308 = vmatprep.subr.mxu0 %v277
        %309 = vmatpush1.msra.mxu0 %v276
        %310 = vmatprep.subr.mxu0 %v279
        %311 = vmatpush1.msra.mxu0 %v278
        %312 = vmatprep.subr.mxu0 %v281
        %313 = vmatpush1.msra.mxu0 %v280
        %314 = vmatprep.subr.mxu0 %v283
        %315 = vmatpush1.msra.mxu0 %v282
        %316 = vmatprep.subr.mxu0 %v285
        %317 = vmatpush1.msra.mxu0 %v284
        %318 = vmatprep.subr.mxu0 %v287
        %319 = vmatpush1.msra.mxu0 %v286
        %320 = vmatprep.subr.mxu0 %v289
        %321 = vmatpush1.msra.mxu0 %v288
        %322 = vmatprep.subr.mxu0 %v291
        %323 = vmatpush1.msra.mxu0 %v290
        %324 = vmatprep.subr.mxu0 %v293
        %325 = vmatpush1.msra.mxu0 %v292
        %326 = vmatprep.subr.mxu0 %v295
        %327 = vmatpush1.msra.mxu0 %v294
        %328 = vmatprep.subr.mxu0 %v297
        %329 = vmatpush1.msra.mxu0 %v296
        %330 = vmatprep.subr.mxu0 0.0
        %331 = vmatpush1.msra.mxu0 0.0
        %332 = vmatprep.subr.mxu0 0.0
        %333 = vmatpush1.msra.mxu0 0.0
        %334 = vmatprep.subr.mxu0 0.0
        %335 = vmatpush1.msra.mxu0 0.0
        %336 = vmatprep.subr.mxu0 0.0
        %337 = vmatpush1.msra.mxu0 0.0
        %338 = vmatprep.subr.mxu0 0.0
        %339 = vmatpush1.msra.mxu0 0.0
        %340 = vmatprep.subr.mxu0 0.0
        %341 = vmatpush1.msra.mxu0 0.0
        %342 = vmatprep.subr.mxu0 0.0
        %343 = vmatpush1.msra.mxu0 0.0
        %344 = vmatprep.subr.mxu0 0.0
        %345 = vmatpush1.msra.mxu0 0.0
        %346 = vmatprep.subr.mxu0 0.0
        %347 = vmatpush1.msra.mxu0 0.0
        %348 = vmatprep.subr.mxu0 0.0
        %349 = vmatpush1.msra.mxu0 0.0
        %350 = vmatprep.subr.mxu0 0.0
        %351 = vmatpush1.msra.mxu0 0.0
        %352 = vmatprep.subr.mxu0 0.0
        %353 = vmatpush1.msra.mxu0 0.0
        %354 = vmatprep.subr.mxu0 0.0
        %355 = vmatpush1.msra.mxu0 0.0
        %356 = vmatprep.subr.mxu0 0.0
        %357 = vmatpush1.msra.mxu0 0.0
        %358 = vmatprep.subr.mxu0 0.0
        %359 = vmatpush1.msra.mxu0 0.0
        %360 = vmatprep.subr.mxu0 0.0
        %361 = vmatpush1.msra.mxu0 0.0
        %362 = vmatprep.mubr.f32.mxu0 0.0
        %363 = vmatmul.mubr.f32.gmra.mrb[0].mxu0 %v176
        %v364 = vpop.f32.mrb[0].mxu0
        %v365 = vadd.f32 0.0, %v364
        %v366 = vpop.f32.mrb[0].mxu0
        %v367 = vadd.f32 0.0, %v366
        %368 = vdwg.mxu0
        %369 = vst [vmem:[%s172] sm:$0xff] %v365
        %370 = vst [vmem:[%s172 + $0x8] sm:$0xff] %v367
        %s371 = sand.u32 %s75, 1
        %s372 = scalar_lea.sflag [#allocation4], %s371
        %s373 = sand.u32 %s75, 1
        %s374 = smul.addr %s373, 16
        %s375 = scalar_lea.vmem [#allocation7], %s374
        // Predicated region
        $region37: #{tpu_custom_call.1} parent=27 // pred_check
          %p376 = pneg %p85
        $region38: #{tpu_custom_call.1} parent=27 // pred_check_branch
          %378 = sbr.rel (%p376) target = $region40
        $region39: #{tpu_custom_call.1} parent=27 // pred_region
          %s379 = smul.u32 2, %s20
          %s381 = ssub.s32 256, 256
          %382 = vsyncadd %s372, %s381
          %s383 = smul.addr %s379, 128
          %s384 = scalar_lea.hbm %s2, %s383
          %s386 = sshll.u32 %s375, 4
          %s387 = int_to_ptr.vmem [resolvable:$true] %s386
          %389 = dma.vmem_to_hbm [thread:$0]  %s387, 256, %s384, %s372
        $region40: #{tpu_custom_call.1} parent=27 // pred_fallthru
          _
      $region28: #{tpu_custom_call.1} parent=5 // pred_fallthru
        _
      %p390 = scmp.le.s32.totalorder 2, %s15
      // Predicated region
      $region41: #{tpu_custom_call.1} parent=5 // pred_check
        %p391 = pneg %p390
      $region42: #{tpu_custom_call.1} parent=5 // pred_check_branch
        %393 = sbr.rel (%p391) target = $region44
      $region43: #{tpu_custom_call.1} parent=5 // pred_region
        %s394 = ssub.s32 %s15, 2
        // Predicated region
        $region45: #{tpu_custom_call.1} parent=43 // pred_check
          %p395 = pneg %p91
        $region46: #{tpu_custom_call.1} parent=43 // pred_check_branch
          %397 = sbr.rel (%p395) target = $region48
        $region47: #{tpu_custom_call.1} parent=43 // pred_region
          %s398 = sand.u32 %s76, 1
          %s399 = scalar_lea.sflag [#allocation4], %s398
          %s400 = sand.u32 %s76, 1
          %s401 = smul.addr %s400, 16
          %s402 = scalar_lea.vmem [#allocation7], %s401
          %403 = dma.done %s399, 256
        $region48: #{tpu_custom_call.1} parent=43 // pred_fallthru
          _
      $region44: #{tpu_custom_call.1} parent=5 // pred_fallthru
        _
    $region6: #{tpu_custom_call.1} parent=1 // loop_footer
      %s19 = sadd.s32 1, %s15
    $region7: #{tpu_custom_call.1} parent=1 // loop_footer_branch
      %14 = sbr.rel target = $region3
    $region8: #{tpu_custom_call.1} parent=1 // loop_exit
      _
    %404 = vsyncpa [#allocation3], 1
    %s405 = scalar_lea.sflag [#allocation3], 1
    %406 = vsyncpa %s405, 1
    %407 = vsyncpa [#allocation6], 1
    %408 = vsyncpa [#allocation4], 1
    %s409 = scalar_lea.sflag [#allocation4], 1
    %410 = vsyncpa %s409, 1

</llo_original>
